<compile_context>
chip_gen: v7x
topology: tpu7x:2x2x1
jax: 0.10.0
libtpu: 0.0.40
codegen_flags: <defaults>
</compile_context>

<pallas_src>
import functools

import jax
import jax.numpy as jnp
from jax.experimental import pallas as pl
from jax.experimental.pallas import tpu as pltpu


_LANE = 128                      # X tiles are multiples of 128 columns
_MAX_TILE_BYTES = 8 << 20        # per-buffer X tile cap (well past the 1-2 MiB knee)
_MIN_TILE_BYTES = 1 << 20        # amortize the ~0.35 us / ~600-cycle per-step cost
_VMEM_LIMIT_CAP = 96 << 20       # never request more scoped VMEM than this


def _cdiv(a, b):
    return -(-a // b)


def _round_up(x, m):
    return _cdiv(x, m) * m


def _vmem_capacity_bytes():
    try:
        cap = getattr(pltpu.get_tpu_info(), "vmem_capacity_bytes", None)
        if cap:
            return int(cap)
    except Exception:
        pass
    return 64 << 20              # conservative default (v7x per-core VMEM)


def _plan(bc, hw, itemsize):
    """Pick (tk, n_split, n_half, n_k_data, vmem_limit) for the gram kernel."""
    vmem_limit = min((_vmem_capacity_bytes() * 3) // 4, _VMEM_LIMIT_CAP)
    gram_bytes = bc * bc * 4
    reserve = 2 * gram_bytes + (2 << 20)            # resident accumulators + slack
    per_buffer = max(_MIN_TILE_BYTES, (vmem_limit - reserve) // 2)
    tile_bytes = min(per_buffer, _MAX_TILE_BYTES)

    c = _cdiv(hw, _LANE)                            # 128-wide column chunks of X
    n_split = 2 if c >= 2 else 1                    # v7x: one half per TensorCore
    t_cap = max(1, tile_bytes // (bc * _LANE * itemsize))
    t_cap = min(t_cap, _cdiv(c, n_split))
    n_k = _round_up(_cdiv(c, t_cap), n_split)       # total k-tiles, multiple of n_split
    t_chunks = _cdiv(c, n_k)                        # balanced tile width (chunks)
    tk = t_chunks * _LANE
    n_half = n_k // n_split                         # k-tiles per split
    n_k_data = _cdiv(hw, tk)                        # tiles that touch valid columns
    return tk, n_split, n_half, n_k_data, vmem_limit


# --------------------------------------------------------------------------
# Kernels
# --------------------------------------------------------------------------
def _gram_partial_kernel(x_ref, part_ref, *, hw, tk, n_half, inv_norm, needs_mask):
    """Accumulate one partial gram  G_p = sum_k X[:, k-tile] @ X[:, k-tile]^T.

    x_ref:    (BC, TK)  native dtype, streamed per grid step (auto double-buffered)
    part_ref: (BC, BC)  f32 resident accumulator for split p (leading dim squeezed)
    """
    p = pl.program_id(0)
    k = pl.program_id(1)

    @pl.when(k == 0)
    def _():
        part_ref[...] = jnp.zeros_like(part_ref)

    x = x_ref[...]
    if needs_mask:
        # Zero columns past the true HW extent: the last real tile is partial
        # (garbage tail from the clamped DMA) and phantom tiles past the data
        # contribute exactly zero.  Mask cost hides in VPU slack.
        start = (p * n_half + k) * tk
        col = jax.lax.broadcasted_iota(jnp.int32, x.shape, 1) + start
        x = jnp.where(col < hw, x, jnp.zeros_like(x))

    part_ref[...] += jax.lax.dot_general(
        x, x,
        dimension_numbers=(((1,), (1,)), ((), ())),     # contract the HW tile
        preferred_element_type=jnp.float32,
    )

    @pl.when(k == n_half - 1)
    def _():
        part_ref[...] *= jnp.float32(inv_norm)


def _mse_kernel(part_ref, syn_ref, loss_ref, *, inv_count):
    """Sum per-core partial grams, MSE vs. target gram, scalar to SMEM.

    part_ref: (n_split, BC, BC) f32 partial grams (already scaled by 1/norm)
    syn_ref:  (BC, BC)          f32 target gram
    loss_ref: (1, 1)            f32 scalar loss in SMEM
    """
    gram = jnp.sum(part_ref[...], axis=0)
    diff = gram - syn_ref[...]
    loss_ref[0, 0] = jnp.sum(diff * diff) * jnp.float32(inv_count)


# --------------------------------------------------------------------------
# Wrappers
# --------------------------------------------------------------------------
def _gram_partials(x, bc, hw):
    """(bc, hw) feature map -> (n_split, bc, bc) f32 partial grams (pre-scaled)."""
    tk, n_split, n_half, n_k_data, vmem_limit = _plan(bc, hw, x.dtype.itemsize)
    last_block = n_k_data - 1
    needs_mask = (n_split * n_half * tk) != hw
    inv_norm = 1.0 / float(bc * hw)

    kernel = functools.partial(
        _gram_partial_kernel, hw=hw, tk=tk, n_half=n_half,
        inv_norm=inv_norm, needs_mask=needs_mask)

    def x_index(p, k):
        # Clamp: tiles past the last data block re-read it (and are masked to
        # zero in-kernel) instead of issuing an out-of-bounds DMA.
        return (0, jnp.minimum(p * n_half + k, last_block))

    return pl.pallas_call(
        kernel,
        out_shape=jax.ShapeDtypeStruct((n_split, bc, bc), jnp.float32),
        grid=(n_split, n_half),
        in_specs=[pl.BlockSpec((bc, tk), x_index)],
        out_specs=pl.BlockSpec((None, bc, bc), lambda p, k: (p, 0, 0)),
        compiler_params=pltpu.CompilerParams(
            dimension_semantics=("parallel", "arbitrary"),
            vmem_limit_bytes=vmem_limit,
        ),
        cost_estimate=pl.CostEstimate(
            flops=int(2 * bc * bc * n_split * n_half * tk),
            transcendentals=0,
            bytes_accessed=int(bc * hw * x.dtype.itemsize + n_split * bc * bc * 4),
        ),
    )(x)


def _mse_from_partials(partials, syn_gram, bc):
    inv_count = 1.0 / float(bc * bc)
    kernel = functools.partial(_mse_kernel, inv_count=inv_count)
    loss = pl.pallas_call(
        kernel,
        out_shape=jax.ShapeDtypeStruct((1, 1), jnp.float32),
        in_specs=[pl.BlockSpec(memory_space=pltpu.MemorySpace.VMEM),
                  pl.BlockSpec(memory_space=pltpu.MemorySpace.VMEM)],
        out_specs=pl.BlockSpec(memory_space=pltpu.MemorySpace.SMEM),
        cost_estimate=pl.CostEstimate(
            flops=int(5 * bc * bc),
            transcendentals=0,
            bytes_accessed=int((partials.size + syn_gram.size) * 4 + 4),
        ),
    )(partials, syn_gram)
    return loss[0, 0]


class StyleLoss:
    """JAX/Pallas port of the PyTorch StyleLoss module (forward semantics).

    Features are NCHW.  Keep them bf16 from the producing layer when possible:
    the gram kernel is HBM-streaming bound and accumulates in f32 regardless.
    """

    def __init__(self, syn_feature):
        b, c, h, w = syn_feature.shape
        bc, hw = b * c, h * w
        x = syn_feature.reshape(bc, hw)          # free view — no HBM copy, no padding
        partials = _gram_partials(x, bc, hw)
        self.syn_gram = jax.lax.stop_gradient(jnp.sum(partials, axis=0))
        self.loss = None

    def __call__(self, style_feature):
        b, c, h, w = style_feature.shape
        bc, hw = b * c, h * w
        x = style_feature.reshape(bc, hw)
        partials = _gram_partials(x, bc, hw)
        self.loss = _mse_from_partials(partials, self.syn_gram.astype(jnp.float32), bc)
        # Module returns its input unchanged (pass-through).
        return style_feature


# --------------------------------------------------------------------------
# Demo / correctness check
# --------------------------------------------------------------------------
def _reference_gram(feature):
    b, c, h, w = feature.shape
    fm = feature.reshape(b * c, h * w).astype(jnp.float32)
    return (fm @ fm.T) / (b * c * h * w)


if __name__ == "__main__":
    key = jax.random.PRNGKey(0)
    k1, k2 = jax.random.split(key)

    # Small shapes consistent with a conv feature map: (b, c, h, w).
    b, c, h, w = 2, 4, 16, 16
    syn_feature = jax.random.normal(k1, (b, c, h, w), dtype=jnp.float32)
    style_feature = jax.random.normal(k2, (b, c, h, w), dtype=jnp.float32)

    module = StyleLoss(syn_feature)
    out = jax.block_until_ready(module(style_feature))
    loss = jax.block_until_ready(module.loss)

    ref_syn = _reference_gram(syn_feature)
    ref_style = _reference_gram(style_feature)
    ref_loss = jnp.mean((ref_style - ref_syn) ** 2)

    assert out.shape == style_feature.shape
    assert jnp.allclose(out, style_feature)
    assert jnp.allclose(module.syn_gram, ref_syn, atol=1e-5, rtol=1e-5)
    assert jnp.allclose(loss, ref_loss, atol=1e-5, rtol=1e-4)

    # Non-128-divisible spatial extent exercises the in-kernel tail mask
    # (hw = 18*18 = 324), i.e. the un-padded streaming path.
    syn_odd = jax.random.normal(k1, (1, 8, 18, 18), dtype=jnp.float32)
    style_odd = jax.random.normal(k2, (1, 8, 18, 18), dtype=jnp.float32)
    mod_odd = StyleLoss(syn_odd)
    mod_odd(style_odd)
    loss_odd = jax.block_until_ready(mod_odd.loss)
    ref_odd = jnp.mean((_reference_gram(style_odd) - _reference_gram(syn_odd)) ** 2)
    assert jnp.allclose(loss_odd, ref_odd, atol=1e-5, rtol=1e-4)

    # Smoke-test the native-bf16 path (half the HBM traffic, f32 accumulation).
    module_bf16 = StyleLoss(syn_feature.astype(jnp.bfloat16))
    module_bf16(style_feature.astype(jnp.bfloat16))
    loss_bf16 = jax.block_until_ready(module_bf16.loss)
    assert bool(jnp.isfinite(loss_bf16))

    print("KERNEL_OK")
</pallas_src>

<mosaic_0001>
module attributes {stable_mosaic.version = 11 : i64} {
  func.func @_gram_partial_kernel(%arg0: i32, %arg1: i32, %arg2: memref<8x128xf32, #tpu.memory_space<vmem>>, %arg3: memref<1x8x8xf32, #tpu.memory_space<vmem>>) attributes {dimension_semantics = [#tpu.dimension_semantics<parallel>, #tpu.dimension_semantics<arbitrary>], iteration_bounds = array<i64: 2, 1>, scalar_prefetch = 0 : i64, scratch_operands = 0 : i64, tpu.core_type = #tpu.core_type<tc>, window_params = [{transform_indices = @transform_0, window_bounds = array<i64: 8, 128>}, {transform_indices = @transform_1, window_bounds = array<i64: 1, 8, 8>}]} {
    %c0_i32 = arith.constant 0 : i32
    %0 = arith.cmpi eq, %arg1, %c0_i32 : i32
    %1 = arith.extui %0 : i1 to i32
    %c0_i32_0 = arith.constant 0 : i32
    %2 = arith.cmpi ne, %1, %c0_i32_0 : i32
    scf.if %2 {
      %cst_10 = arith.constant 0.000000e+00 : f32
      %14 = vector.broadcast %cst_10 : f32 to vector<8x8xf32>
      %c0_11 = arith.constant 0 : index
      %c0_12 = arith.constant 0 : index
      %c0_13 = arith.constant 0 : index
      %15 = vector.load %arg3[%c0_11, %c0_12, %c0_13] : memref<1x8x8xf32, #tpu.memory_space<vmem>>, vector<1x8x8xf32>
      %16 = vector.shape_cast %15 : vector<1x8x8xf32> to vector<8x8xf32>
      %17 = vector.shape_cast %14 : vector<8x8xf32> to vector<1x8x8xf32>
      tpu.vector_store %arg3[%c0_11, %c0_12, %c0_13], %17 {strides = array<i32>} : memref<1x8x8xf32, #tpu.memory_space<vmem>>, vector<1x8x8xf32>,
    } else {
    }
    %c0 = arith.constant 0 : index
    %c0_1 = arith.constant 0 : index
    %3 = vector.load %arg2[%c0, %c0_1] : memref<8x128xf32, #tpu.memory_space<vmem>>, vector<8x128xf32>
    %c0_2 = arith.constant 0 : index
    %c0_3 = arith.constant 0 : index
    %c0_4 = arith.constant 0 : index
    %4 = vector.load %arg3[%c0_2, %c0_3, %c0_4] : memref<1x8x8xf32, #tpu.memory_space<vmem>>, vector<1x8x8xf32>
    %5 = vector.shape_cast %4 : vector<1x8x8xf32> to vector<8x8xf32>
    %cst = arith.constant dense<0.000000e+00> : vector<8x8xf32>
    %6 = tpu.matmul %3, %3, %cst {dimension_numbers = #tpu.dot_dimension_numbers<[1], [1], [0], [0], [0, 0, 1, 0], [], []>} : vector<8x128xf32>, vector<8x128xf32>, vector<8x8xf32> -> vector<8x8xf32>
    %7 = arith.addf %5, %6 : vector<8x8xf32>
    %c0_5 = arith.constant 0 : index
    %c0_6 = arith.constant 0 : index
    %c0_7 = arith.constant 0 : index
    %8 = vector.load %arg3[%c0_5, %c0_6, %c0_7] : memref<1x8x8xf32, #tpu.memory_space<vmem>>, vector<1x8x8xf32>
    %9 = vector.shape_cast %8 : vector<1x8x8xf32> to vector<8x8xf32>
    %10 = vector.shape_cast %7 : vector<8x8xf32> to vector<1x8x8xf32>
    tpu.vector_store %arg3[%c0_5, %c0_6, %c0_7], %10 {strides = array<i32>} : memref<1x8x8xf32, #tpu.memory_space<vmem>>, vector<1x8x8xf32>,
    %c0_i32_8 = arith.constant 0 : i32
    %11 = arith.cmpi eq, %arg1, %c0_i32_8 : i32
    %12 = arith.extui %11 : i1 to i32
    %c0_i32_9 = arith.constant 0 : i32
    %13 = arith.cmpi ne, %12, %c0_i32_9 : i32
    scf.if %13 {
      %c0_10 = arith.constant 0 : index
      %c0_11 = arith.constant 0 : index
      %c0_12 = arith.constant 0 : index
      %14 = vector.load %arg3[%c0_10, %c0_11, %c0_12] : memref<1x8x8xf32, #tpu.memory_space<vmem>>, vector<1x8x8xf32>
      %15 = vector.shape_cast %14 : vector<1x8x8xf32> to vector<8x8xf32>
      %cst_13 = arith.constant 4.8828125E-4 : f32
      %16 = vector.broadcast %cst_13 : f32 to vector<8x8xf32>
      %17 = arith.mulf %15, %16 : vector<8x8xf32>
      %c0_14 = arith.constant 0 : index
      %c0_15 = arith.constant 0 : index
      %c0_16 = arith.constant 0 : index
      %18 = vector.load %arg3[%c0_14, %c0_15, %c0_16] : memref<1x8x8xf32, #tpu.memory_space<vmem>>, vector<1x8x8xf32>
      %19 = vector.shape_cast %18 : vector<1x8x8xf32> to vector<8x8xf32>
      %20 = vector.shape_cast %17 : vector<8x8xf32> to vector<1x8x8xf32>
      tpu.vector_store %arg3[%c0_14, %c0_15, %c0_16], %20 {strides = array<i32>} : memref<1x8x8xf32, #tpu.memory_space<vmem>>, vector<1x8x8xf32>,
    } else {
    }
    return
  }
  func.func @transform_0(%arg0: i32, %arg1: i32) -> (i32, i32) {
    %c1_i32 = arith.constant 1 : i32
    %0 = arith.muli %arg0, %c1_i32 : i32
    %1 = arith.addi %0, %arg1 : i32
    %c1_i32_0 = arith.constant 1 : i32
    %2 = arith.minsi %1, %c1_i32_0 : i32
    %c0_i32 = arith.constant 0 : i32
    %c0_i32_1 = arith.constant 0 : i32
    return %c0_i32, %2 : i32, i32
  }
  func.func @transform_1(%arg0: i32, %arg1: i32) -> (i32, i32, i32) {
    %c0_i32 = arith.constant 0 : i32
    %c0_i32_0 = arith.constant 0 : i32
    %c0_i32_1 = arith.constant 0 : i32
    return %arg0, %c0_i32, %c0_i32_0 : i32, i32, i32
  }
}

</mosaic_0001>

<llo_original>
// kernel: tpu_custom_call.1
$region0: #{tpu_custom_call.1}
  #allocation0 [shape = 'u32[]', space=smem, size = 0x4, offset = 0x4, fixed_abs, tag = 'smem constant byte address 0x4 - core index']
  #allocation1 [shape = 'u32[144,128]{1,0:T(1,128)}', space=vmem, size = 0x12000, scoped, tag = 'internal scratch']
  %s0 = inlined_call_operand.hbm [shape: f32[8,256], index: 0, kind: input, shape index: {}]
  %s1 = inlined_call_operand.hbm [shape: f32[2,8,8], index: 1, kind: output, shape index: {}]
  %s2 = sld [smem:[#allocation0]]
  $region49: #{tpu_custom_call.1} parent=0
    _
  %s4 = ssub.s32 1, %s2
  %s5 = scalar_select 0, %s4, %s2
  $region1: #{tpu_custom_call.1} parent=0
    #allocation2 [shape = 'u8[8192]{0}', space=vmem, size = 0x2000, scoped, tag = 'input window, operand 0']
    #allocation3 [shape = 's32[2]{0}', space=sflag, size = 0x8, scoped, tag = 'scoped memory for tpu_custom_call.1']
    #allocation4 [shape = 's32[2]{0}', space=sflag, size = 0x8, scoped, tag = 'scoped memory for tpu_custom_call.1']
    #allocation5 [shape = 'u8[8192]{0}', space=vmem, size = 0x2000, scoped, tag = 'output window, operand 0']
    %6 = vsyncpa [#allocation3], 0
    %s7 = scalar_lea.sflag [#allocation3], 1
    %8 = vsyncpa %s7, 0
    %9 = vsyncpa [#allocation4], 0
    %s10 = scalar_lea.sflag [#allocation4], 1
    %11 = vsyncpa %s10, 0
    loop: start=0, step=1, limit=4
    $region2: #{tpu_custom_call.1} parent=1 // loop_pre_header
      _
    $region3: #{tpu_custom_call.1} parent=1 // loop_header
      %s13 = sphi 0, %s17
      %p14 = scmp.ge.s32.totalorder %s13, 4
      %s20 = sphi 0, %s32
      %s21 = sphi 0, %s28
      %s22 = sphi 0, %s20
      %s23 = sphi 0, %s21
      %s24 = sphi 0, %s22
      %s25 = sphi 0, %s23
      %s41 = sphi 0, %s43
      %s44 = sphi 0, %s41
      %s45 = sphi 0, %s44
      %s61 = sphi 0, %s45
      %s67 = sphi 0, %s69
      %s70 = sphi 0, %s67
      %s71 = sphi 0, %s70
      %s87 = sphi 0, %s71
    $region4: #{tpu_custom_call.1} parent=1 // loop_header_branch
      %16 = sbr.rel (%p14) target = $region8
    $region5: #{tpu_custom_call.1} parent=1 // loop_body
      %s18 = ssub.s32 %s13, 1
      %s19 = ssub.s32 %s13, 2
      %s26 = sadd.s32 1, %s21
      %p27 = scmp.ge.s32.totalorder %s26, 1
      %s28 = scalar_select %p27, 0, %s26
      %s29 = sadd.s32 1, %s20
      %s30 = scalar_select %p27, %s29, %s20
      %p31 = scmp.ge.s32.totalorder %s30, 2
      %s32 = scalar_select %p31, 0, %s30
      %s33 = sadd.s32 %s20, %s21
      %p34 = scmp.lt.s32.totalorder %s33, 1
      %s35 = scalar_select %p34, %s33, 1
      %s36 = sadd.s32 %s32, %s28
      %p37 = scmp.lt.s32.totalorder %s36, 1
      %s38 = scalar_select %p37, %s36, 1
      %s39 = ssub.s32 %s35, %s38
      %p40 = scmp.eq.s32.totalorder %s39, 0
      %s42 = sadd.s32 %s41, 1
      %s43 = scalar_select %p40, %s41, %s42
      %p46 = pneg %p40
      %p47 = scmp.eq.s32.totalorder %s13, 1
      %p48 = por %p46, %p47
      %p49 = scmp.ne.s32.totalorder %s41, %s44
      %p50 = scmp.eq.s32.totalorder %s13, 0
      %p51 = por %p49, %p50
      %p52 = scmp.ne.s32.totalorder %s41, %s44
      %p53 = scmp.eq.s32.totalorder %s18, 1
      %p54 = por %p52, %p53
      %p55 = scmp.ne.s32.totalorder %s44, %s45
      %p56 = scmp.eq.s32.totalorder %s18, 0
      %p57 = por %p55, %p56
      %p58 = scmp.ne.s32.totalorder %s44, %s45
      %p59 = scmp.eq.s32.totalorder %s19, 1
      %p60 = por %p58, %p59
      %p62 = scmp.ne.s32.totalorder %s45, %s61
      %p63 = scmp.eq.s32.totalorder %s19, 0
      %p64 = por %p62, %p63
      %s65 = ssub.s32 %s20, %s32
      %p66 = scmp.eq.s32.totalorder %s65, 0
      %s68 = sadd.s32 %s67, 1
      %s69 = scalar_select %p66, %s67, %s68
      %p72 = pneg %p66
      %p73 = scmp.eq.s32.totalorder %s13, 1
      %p74 = por %p72, %p73
      %p75 = scmp.ne.s32.totalorder %s67, %s70
      %p76 = scmp.eq.s32.totalorder %s13, 0
      %p77 = por %p75, %p76
      %p78 = scmp.ne.s32.totalorder %s67, %s70
      %p79 = scmp.eq.s32.totalorder %s18, 1
      %p80 = por %p78, %p79
      %p81 = scmp.ne.s32.totalorder %s70, %s71
      %p82 = scmp.eq.s32.totalorder %s18, 0
      %p83 = por %p81, %p82
      %p84 = scmp.ne.s32.totalorder %s70, %s71
      %p85 = scmp.eq.s32.totalorder %s19, 1
      %p86 = por %p84, %p85
      %p88 = scmp.ne.s32.totalorder %s71, %s87
      %p89 = scmp.eq.s32.totalorder %s19, 0
      %p90 = por %p88, %p89
      %p91 = scmp.le.s32.totalorder 1, %s13
      %p92 = scmp.lt.s32.totalorder %s13, 3
      %p93 = pnand %p91, %p92
      %p94 = pneg %p93
      // Predicated region
      $region9: #{tpu_custom_call.1} parent=5 // pred_check
        _
      $region10: #{tpu_custom_call.1} parent=5 // pred_check_branch
        %96 = sbr.rel (%p93) target = $region12
      $region11: #{tpu_custom_call.1} parent=5 // pred_region
        %s97 = ssub.s32 %s13, 1
      $region12: #{tpu_custom_call.1} parent=5 // pred_fallthru
        _
      %p98 = scmp.lt.s32.totalorder %s13, 2
      // Predicated region
      $region13: #{tpu_custom_call.1} parent=5 // pred_check
        %p99 = pneg %p98
      $region14: #{tpu_custom_call.1} parent=5 // pred_check_branch
        %101 = sbr.rel (%p99) target = $region16
      $region15: #{tpu_custom_call.1} parent=5 // pred_region
        // Predicated region
        $region17: #{tpu_custom_call.1} parent=15 // pred_check
          %p102 = pneg %p51
        $region18: #{tpu_custom_call.1} parent=15 // pred_check_branch
          %104 = sbr.rel (%p102) target = $region20
        $region19: #{tpu_custom_call.1} parent=15 // pred_region
          %s105 = sand.u32 %s41, 1
          %s106 = scalar_lea.sflag [#allocation3], %s105
          %s107 = sand.u32 %s41, 1
          %s108 = smul.addr %s107, 8
          %s109 = scalar_lea.vmem [#allocation2], %s108
          %s110 = sadd.s32 %s20, %s21
          %p111 = scmp.lt.s32.totalorder %s110, 1
          %s112 = scalar_select %p111, %s110, 1
          %s114 = ssub.s32 128, 128
          %115 = vsyncadd %s106, %s114
          %s116 = smul.addr %s112, 128
          %s117 = scalar_lea.hbm %s0, %s116
          %s119 = sshll.u32 %s109, 4
          %s120 = int_to_ptr.vmem [resolvable:$true] %s119
          %122 = dma.hbm_to_vmem [thread:$0]  %s117, 128, %s120, %s106
        $region20: #{tpu_custom_call.1} parent=15 // pred_fallthru
          _
      $region16: #{tpu_custom_call.1} parent=5 // pred_fallthru
        _
      %p123 = scmp.le.s32.totalorder 1, %s13
      %p124 = scmp.lt.s32.totalorder %s13, 3
      %p125 = pnand %p123, %p124
      %p126 = pneg %p125
      // Predicated region
      $region21: #{tpu_custom_call.1} parent=5 // pred_check
        _
      $region22: #{tpu_custom_call.1} parent=5 // pred_check_branch
        %128 = sbr.rel (%p125) target = $region24
      $region23: #{tpu_custom_call.1} parent=5 // pred_region
        %s129 = ssub.s32 %s13, 1
        %s130 = sand.u32 %s44, 1
        %s131 = scalar_lea.sflag [#allocation3], %s130
        %s132 = sand.u32 %s44, 1
        %s133 = smul.addr %s132, 8
        %s134 = scalar_lea.vmem [#allocation2], %s133
        // Predicated region
        $region25: #{tpu_custom_call.1} parent=23 // pred_check
          %p135 = pneg %p57
        $region26: #{tpu_custom_call.1} parent=23 // pred_check_branch
          %137 = sbr.rel (%p135) target = $region28
        $region27: #{tpu_custom_call.1} parent=23 // pred_region
          %138 = dma.done %s131, 128
        $region28: #{tpu_custom_call.1} parent=23 // pred_fallthru
          _
        %s139 = sand.u32 %s44, 1
        %s140 = scalar_lea.sflag [#allocation3], %s139
        %s141 = sand.u32 %s44, 1
        %s142 = smul.addr %s141, 8
        %s143 = scalar_lea.vmem [#allocation2], %s142
        %p144 = pneg %p57
        %p145 = pneg %p54
        %p146 = pneg %p83
        %p147 = pneg %p80
        %s148 = sand.u32 %s70, 1
        %s149 = scalar_lea.sflag [#allocation4], %s148
        %s150 = sand.u32 %s70, 1
        %s151 = smul.addr %s150, 8
        %s152 = scalar_lea.vmem [#allocation5], %s151
        %s153 = sadd.s32 %s22, %s23
        %p154 = scmp.lt.s32.totalorder %s153, 1
        %s155 = scalar_select %p154, %s153, 1
        %p156 = scmp.eq.s32.totalorder %s23, 0
        // Predicated region
        $region29: #{tpu_custom_call.1} parent=23 // pred_check
          %p157 = pneg %p156
        $region30: #{tpu_custom_call.1} parent=23 // pred_check_branch
          %159 = sbr.rel (%p157) target = $region32
        $region31: #{tpu_custom_call.1} parent=23 // pred_region
          %vm160 = vcmask 64512
          %161 = vst.msk [vmem:[%s152] sm:$0xff] %vm160, 0.0
        $region32: #{tpu_custom_call.1} parent=23 // pred_fallthru
          _
        %v162 = vld [vmem:[%s134] sm:$0xff]
        %v163 = vld [vmem:[%s152] sm:$0xff]
        %164 = vmatprep.subr.mxu0 0.0
        %165 = vmatpush1.xpose.msra.mxu0 %v162
        %166 = vmatprep.subr.mxu0 0.0
        %167 = vmatpush1.xpose.msra.mxu0 0.0
        %168 = vmatprep.subr.mxu0 0.0
        %169 = vmatpush1.xpose.msra.mxu0 0.0
        %170 = vmatprep.subr.mxu0 0.0
        %171 = vmatpush1.xpose.msra.mxu0 0.0
        %172 = vmatprep.subr.mxu0 0.0
        %173 = vmatpush1.xpose.msra.mxu0 0.0
        %174 = vmatprep.subr.mxu0 0.0
        %175 = vmatpush1.xpose.msra.mxu0 0.0
        %176 = vmatprep.subr.mxu0 0.0
        %177 = vmatpush1.xpose.msra.mxu0 0.0
        %178 = vmatprep.subr.mxu0 0.0
        %179 = vmatpush1.xpose.msra.mxu0 0.0
        %180 = vmatprep.subr.mxu0 0.0
        %181 = vmatpush1.xpose.msra.mxu0 0.0
        %182 = vmatprep.subr.mxu0 0.0
        %183 = vmatpush1.xpose.msra.mxu0 0.0
        %184 = vmatprep.subr.mxu0 0.0
        %185 = vmatpush1.xpose.msra.mxu0 0.0
        %186 = vmatprep.subr.mxu0 0.0
        %187 = vmatpush1.xpose.msra.mxu0 0.0
        %188 = vmatprep.subr.mxu0 0.0
        %189 = vmatpush1.xpose.msra.mxu0 0.0
        %190 = vmatprep.subr.mxu0 0.0
        %191 = vmatpush1.xpose.msra.mxu0 0.0
        %192 = vmatprep.subr.mxu0 0.0
        %193 = vmatpush1.xpose.msra.mxu0 0.0
        %194 = vmatprep.subr.mxu0 0.0
        %195 = vmatpush1.xpose.msra.mxu0 0.0
        %196 = vmatprep.subr.mxu0 0.0
        %197 = vmatpush1.xpose.msra.mxu0 0.0
        %198 = vmatprep.subr.mxu0 0.0
        %199 = vmatpush1.xpose.msra.mxu0 0.0
        %200 = vmatprep.subr.mxu0 0.0
        %201 = vmatpush1.xpose.msra.mxu0 0.0
        %202 = vmatprep.subr.mxu0 0.0
        %203 = vmatpush1.xpose.msra.mxu0 0.0
        %204 = vmatprep.subr.mxu0 0.0
        %205 = vmatpush1.xpose.msra.mxu0 0.0
        %206 = vmatprep.subr.mxu0 0.0
        %207 = vmatpush1.xpose.msra.mxu0 0.0
        %208 = vmatprep.subr.mxu0 0.0
        %209 = vmatpush1.xpose.msra.mxu0 0.0
        %210 = vmatprep.subr.mxu0 0.0
        %211 = vmatpush1.xpose.msra.mxu0 0.0
        %212 = vmatprep.subr.mxu0 0.0
        %213 = vmatpush1.xpose.msra.mxu0 0.0
        %214 = vmatprep.subr.mxu0 0.0
        %215 = vmatpush1.xpose.msra.mxu0 0.0
        %216 = vmatprep.subr.mxu0 0.0
        %217 = vmatpush1.xpose.msra.mxu0 0.0
        %218 = vmatprep.subr.mxu0 0.0
        %219 = vmatpush1.xpose.msra.mxu0 0.0
        %220 = vmatprep.subr.mxu0 0.0
        %221 = vmatpush1.xpose.msra.mxu0 0.0
        %222 = vmatprep.subr.mxu0 0.0
        %223 = vmatpush1.xpose.msra.mxu0 0.0
        %224 = vmatprep.subr.mxu0 0.0
        %225 = vmatpush1.xpose.msra.mxu0 0.0
        %226 = vmatprep.subr.mxu0 0.0
        %227 = vmatpush1.xpose.msra.mxu0 0.0
        %228 = vmatprep.mubr.f32.mxu0 0.0
        %229 = vmatmul.mubr.f32.gmra.mrb[0].mxu0 %v162
        %v230 = vpop.f32.mrb[0].mxu0
        %v231 = vadd.f32 0.0, %v230
        %v232 = vpop.f32.mrb[0].mxu0
        %233 = vdwg.mxu0
        %v234 = vadd.f32 %v163, %v231
        %vm235 = vcmask 64512
        %236 = vst.msk [vmem:[%s152] sm:$0xff] %vm235, %v234
        // Predicated region
        $region33: #{tpu_custom_call.1} parent=23 // pred_check
          %p237 = pneg %p156
        $region34: #{tpu_custom_call.1} parent=23 // pred_check_branch
          %239 = sbr.rel (%p237) target = $region36
        $region35: #{tpu_custom_call.1} parent=23 // pred_region
          %v240 = vld [vmem:[%s152] sm:$0xff]
          %v241 = vmul.f32 %v240, 0.00048828125
          %242 = vst.msk [vmem:[%s152] sm:$0xff] %vm235, %v241
        $region36: #{tpu_custom_call.1} parent=23 // pred_fallthru
          _
        %s243 = sand.u32 %s70, 1
        %s244 = scalar_lea.sflag [#allocation4], %s243
        %s245 = sand.u32 %s70, 1
        %s246 = smul.addr %s245, 8
        %s247 = scalar_lea.vmem [#allocation5], %s246
        // Predicated region
        $region37: #{tpu_custom_call.1} parent=23 // pred_check
          %p248 = pneg %p80
        $region38: #{tpu_custom_call.1} parent=23 // pred_check_branch
          %250 = sbr.rel (%p248) target = $region40
        $region39: #{tpu_custom_call.1} parent=23 // pred_region
          %s252 = ssub.s32 128, 128
          %253 = vsyncadd %s244, %s252
          %s254 = smul.addr %s22, 128
          %s255 = scalar_lea.hbm %s1, %s254
          %s257 = sshll.u32 %s247, 4
          %s258 = int_to_ptr.vmem [resolvable:$true] %s257
          %260 = dma.vmem_to_hbm [thread:$0]  %s258, 128, %s255, %s244
        $region40: #{tpu_custom_call.1} parent=23 // pred_fallthru
          _
      $region24: #{tpu_custom_call.1} parent=5 // pred_fallthru
        _
      %p261 = scmp.le.s32.totalorder 2, %s13
      // Predicated region
      $region41: #{tpu_custom_call.1} parent=5 // pred_check
        %p262 = pneg %p261
      $region42: #{tpu_custom_call.1} parent=5 // pred_check_branch
        %264 = sbr.rel (%p262) target = $region44
      $region43: #{tpu_custom_call.1} parent=5 // pred_region
        %s265 = ssub.s32 %s13, 2
        // Predicated region
        $region45: #{tpu_custom_call.1} parent=43 // pred_check
          %p266 = pneg %p86
        $region46: #{tpu_custom_call.1} parent=43 // pred_check_branch
          %268 = sbr.rel (%p266) target = $region48
        $region47: #{tpu_custom_call.1} parent=43 // pred_region
          %s269 = sand.u32 %s71, 1
          %s270 = scalar_lea.sflag [#allocation4], %s269
          %s271 = sand.u32 %s71, 1
          %s272 = smul.addr %s271, 8
          %s273 = scalar_lea.vmem [#allocation5], %s272
          %274 = dma.done %s270, 128
        $region48: #{tpu_custom_call.1} parent=43 // pred_fallthru
          _
      $region44: #{tpu_custom_call.1} parent=5 // pred_fallthru
        _
    $region6: #{tpu_custom_call.1} parent=1 // loop_footer
      %s17 = sadd.s32 1, %s13
    $region7: #{tpu_custom_call.1} parent=1 // loop_footer_branch
      %12 = sbr.rel target = $region3
    $region8: #{tpu_custom_call.1} parent=1 // loop_exit
      _
    %275 = vsyncpa [#allocation3], 1
    %s276 = scalar_lea.sflag [#allocation3], 1
    %277 = vsyncpa %s276, 1
    %278 = vsyncpa [#allocation4], 1
    %s279 = scalar_lea.sflag [#allocation4], 1
    %280 = vsyncpa %s279, 1

</llo_original>
